<compile_context>
chip_gen: v7x
topology: tpu7x:2x2x1
jax: 0.10.0
libtpu: 0.0.40
codegen_flags: <defaults>
</compile_context>

<pallas_src>
import functools

import numpy as np
import jax
import jax.numpy as jnp
from jax import lax
from jax.experimental import pallas as pl
from jax.experimental.pallas import tpu as pltpu

NUM_IN = 32          # num_in
MIDS = 4             # mids
NUM_S = MIDS * MIDS  # 16
NUM_N = MIDS * MIDS  # 16


# ----------------------------------------------------------------------------
# Host-side helpers (glue)
# ----------------------------------------------------------------------------
def adaptive_pool_crop_matrix(H, W, mids):
    """P (num_n, H*W) s.t. x @ P.T == AdaptiveAvgPool2d((mids+2,)*2)(x)[1:-1,1:-1]."""
    out = mids + 2
    P = np.zeros((mids * mids, H * W), dtype=np.float32)
    for oi in range(1, out - 1):
        hs = (oi * H) // out
        he = -((-(oi + 1) * H) // out)       # ceil((oi+1)*H/out)
        for oj in range(1, out - 1):
            ws = (oj * W) // out
            we = -((-(oj + 1) * W) // out)
            cnt = float((he - hs) * (we - ws))
            r = (oi - 1) * mids + (oj - 1)
            for ii in range(hs, he):
                for jj in range(ws, we):
                    P[r, ii * W + jj] = 1.0 / cnt
    return jnp.asarray(P)


def bilinear_resize_nchw(img, out_h, out_w):
    """Matches torch.nn.functional.interpolate(mode='bilinear', align_corners=False)."""
    _, _, in_h, in_w = img.shape

    def coords(out_size, in_size):
        i = jnp.arange(out_size, dtype=jnp.float32)
        src = (i + 0.5) * (in_size / out_size) - 0.5
        src = jnp.clip(src, 0.0, in_size - 1.0)
        i0 = jnp.floor(src).astype(jnp.int32)
        i1 = jnp.minimum(i0 + 1, in_size - 1)
        w1 = src - i0.astype(jnp.float32)
        return i0, i1, 1.0 - w1, w1

    y0, y1, wy0, wy1 = coords(out_h, in_h)
    x0, x1, wx0, wx1 = coords(out_w, in_w)
    rows = (img[:, :, y0, :] * wy0[None, None, :, None]
            + img[:, :, y1, :] * wy1[None, None, :, None])
    out = (rows[:, :, :, x0] * wx0[None, None, None, :]
           + rows[:, :, :, x1] * wx1[None, None, None, :])
    return out


# ----------------------------------------------------------------------------
# Pallas kernel: full GFAM math for one batch element (one grid step)
# ----------------------------------------------------------------------------
def gfam_kernel(x_ref, e_ref, p_ref, wsp_ref, bsp_ref, w1t_ref, b1_ref,
                w2_ref, we_ref, out_ref):
    f32, bf16 = jnp.float32, jnp.bfloat16
    dot = functools.partial(jnp.dot, preferred_element_type=f32)
    dotg = functools.partial(lax.dot_general, preferred_element_type=f32)

    x = x_ref[...]                                      # (C, HW)  bf16
    e = e_ref[...].astype(f32)                          # (2, HW)

    # softmax over the 2 edge channels, keep channel 1  ==  sigmoid(e1 - e0)
    edge = jax.nn.sigmoid(e[1:2, :] - e[0:1, :])        # (1, HW)  f32

    # fused conv_state + conv_proj (1x1 convs): one lane-dense bf16 MXU matmul
    sp = dot(wsp_ref[...], x) + bsp_ref[...]            # (2*num_s, HW) f32
    x_state = sp[:NUM_S, :]
    x_proj = sp[NUM_S:, :]
    x_mask = (x_proj * edge).astype(bf16)

    # adaptive avg-pool (mids+2)^2 + crop [1:-1,1:-1] as a matmul against the
    # lane-dense pooling matrix P (num_n, HW), contracting the lane dims.
    x_anchor = dotg(x_mask, p_ref[...],
                    (((1,), (1,)), ((), ())))           # (num_s, num_n) f32

    # projection matrix: x_anchor^T @ x_proj, softmax over nodes (torch dim=1)
    xpr = dotg(x_anchor.astype(bf16), x_proj.astype(bf16),
               (((0,), (0,)), ((), ())))                # (num_n, HW) f32
    xpr = jnp.exp(xpr - jnp.max(xpr, axis=0, keepdims=True))
    xpr = xpr * pl.reciprocal(jnp.sum(xpr, axis=0, keepdims=True), approx=True)
    xpr_bf = xpr.astype(bf16)

    # project state onto the nodes: x_state @ xpr^T (lane-dim contraction)
    x_n_state = dotg(x_state.astype(bf16), xpr_bf,
                     (((1,), (1,)), ((), ())))          # (num_s, num_n) f32

    # GCN: conv1 over nodes (pre-transposed weight), residual, conv2, relu
    h = dot(x_n_state.astype(bf16), w1t_ref[...]) + b1_ref[...]
    h = h - x_n_state
    x_n_rel = jnp.maximum(dot(w2_ref[...], h.astype(bf16)), 0.0)   # (num_s, num_n)

    # conv_extend folded into node space (tiny (C,num_s)x(num_s,num_n) matmul),
    # then a single back-projection matmul and the residual add -- no scratch.
    wxr = dot(we_ref[...], x_n_rel.astype(bf16))        # (C, num_n) f32
    delta = dot(wxr.astype(bf16), xpr_bf)               # (C, HW)    f32
    out_ref[...] = (x.astype(f32) + delta).astype(out_ref.dtype)


# ----------------------------------------------------------------------------
# Wrapper
# ----------------------------------------------------------------------------
@jax.jit
def gfam_forward(x, edge, params, P):
    n, c, h, w = x.shape
    hw = h * w
    ec = edge.shape[1]

    # bilinear resize of edge (align_corners=False); free reshapes into
    # lane-dense (N, C, HW) slabs.  Activation HBM streams stored as bf16
    # (the MXU consumes bf16 at default precision; accumulation stays f32).
    edge_i = bilinear_resize_nchw(edge, h, w)                     # (n, 2, h, w)
    x_nc = x.reshape(n, c, hw).astype(jnp.bfloat16)
    e_nc = edge_i.reshape(n, ec, hw).astype(jnp.bfloat16)

    ws, bs, wp, bp, w1, b1, w2, we = params
    wsp = jnp.concatenate([ws, wp], axis=0).astype(jnp.bfloat16)  # (2*num_s, C)
    bsp = jnp.concatenate([bs, bp], axis=0)                       # (2*num_s, 1) f32
    w1t = jnp.transpose(w1).astype(jnp.bfloat16)                  # (num_n, num_n)
    p_bf = P.astype(jnp.bfloat16)                                 # (num_n, HW) lane-dense
    w2_bf = w2.astype(jnp.bfloat16)
    we_bf = we.astype(jnp.bfloat16)

    # Explicit VMEM budget for the per-step blocks (double-buffered pipeline).
    xb = c * hw * 2                      # x block, bf16
    eb = 16 * hw * 2                     # (2, HW) bf16 block pads to 16 sublanes
    ob = c * hw * 2                      # out block, bf16
    pb = NUM_S * hw * 2                  # pooling matrix, bf16
    vmem_need = 2 * (xb + eb + ob) + pb + (64 << 10)   # + small weights/biases
    # TODO(synk): for very large H*W (vmem_need beyond ~24 MiB) tile the spatial
    # axis (3-pass anchor / project / back-project) so blocks fit v7x's 64 MiB.
    vmem_limit = int(min(max(4 * vmem_need, 16 << 20), 48 << 20))

    full = lambda a: pl.BlockSpec(a.shape, lambda i: (0,) * a.ndim)

    grid_spec = pltpu.PrefetchScalarGridSpec(
        num_scalar_prefetch=0,
        grid=(n,),                                    # one batch element / step
        in_specs=[
            pl.BlockSpec((None, c, hw), lambda i: (i, 0, 0)),
            pl.BlockSpec((None, ec, hw), lambda i: (i, 0, 0)),
            full(p_bf), full(wsp), full(bsp), full(w1t), full(b1),
            full(w2_bf), full(we_bf),
        ],
        out_specs=pl.BlockSpec((None, c, hw), lambda i: (i, 0, 0)),
    )
    out_nc = pl.pallas_call(
        gfam_kernel,
        out_shape=jax.ShapeDtypeStruct((n, c, hw), jnp.bfloat16),
        grid_spec=grid_spec,
        input_output_aliases={0: 0},     # out = x + delta, written in place
        compiler_params=pltpu.CompilerParams(
            dimension_semantics=("parallel",),
            vmem_limit_bytes=vmem_limit),
    )(x_nc, e_nc, p_bf, wsp, bsp, w1t, b1, w2_bf, we_bf)
    return out_nc.reshape(n, c, h, w)


# ----------------------------------------------------------------------------
# Pure-JAX reference (module semantics, high precision) for a smoke check
# ----------------------------------------------------------------------------
def gfam_reference(x, edge, params, P):
    n, c, h, w = x.shape
    hw = h * w
    ws, bs, wp, bp, w1, b1, w2, we = params
    dot = functools.partial(jnp.matmul, precision=jax.lax.Precision.HIGHEST)

    edge_i = bilinear_resize_nchw(edge, h, w).reshape(n, edge.shape[1], hw)
    edge_sm = jax.nn.softmax(edge_i, axis=1)[:, 1:2, :]           # (n,1,HW)
    x_flat = x.reshape(n, c, hw)

    x_state = dot(ws[None], x_flat) + bs[None]                    # (n,num_s,HW)
    x_proj = dot(wp[None], x_flat) + bp[None]
    x_mask = x_proj * edge_sm
    x_anchor = dot(x_mask, P.T[None])                             # (n,num_s,num_n)
    xpr = dot(jnp.swapaxes(x_anchor, 1, 2), x_proj)               # (n,num_n,HW)
    xpr = jax.nn.softmax(xpr, axis=1)
    x_n_state = dot(x_state, jnp.swapaxes(xpr, 1, 2))             # (n,num_s,num_n)
    hcn = dot(x_n_state, w1.T[None]) + b1[None]
    hcn = hcn - x_n_state
    x_n_rel = jnp.maximum(dot(w2[None], hcn), 0.0)
    x_state_new = dot(x_n_rel, xpr)
    out = x_flat + dot(we[None], x_state_new)
    return out.reshape(n, c, h, w)


# ----------------------------------------------------------------------------
if __name__ == "__main__":
    N, H, W = 2, 16, 16
    key = jax.random.PRNGKey(0)
    keys = jax.random.split(key, 10)

    def uinit(k, shape, fan_in):
        bound = 1.0 / np.sqrt(fan_in)
        return jax.random.uniform(k, shape, jnp.float32, -bound, bound)

    # Parameters (PyTorch conv weights with kernel-size-1 dims squeezed):
    ws = uinit(keys[0], (NUM_S, NUM_IN), NUM_IN)   # conv_state.weight
    bs = uinit(keys[1], (NUM_S, 1), NUM_IN)        # conv_state.bias
    wp = uinit(keys[2], (NUM_S, NUM_IN), NUM_IN)   # conv_proj.weight
    bp = uinit(keys[3], (NUM_S, 1), NUM_IN)        # conv_proj.bias
    w1 = uinit(keys[4], (NUM_N, NUM_N), NUM_N)     # gcn.conv1.weight
    b1 = uinit(keys[5], (1, NUM_N), NUM_N)         # gcn.conv1.bias
    w2 = uinit(keys[6], (NUM_S, NUM_S), NUM_S)     # gcn.conv2.weight (bias=False)
    we = uinit(keys[7], (NUM_IN, NUM_S), NUM_S)    # conv_extend.weight (bias=False)
    params = (ws, bs, wp, bp, w1, b1, w2, we)

    x = jax.random.normal(keys[8], (N, NUM_IN, H, W), jnp.float32)
    edge = jax.random.normal(keys[9], (N, 2, 8, 8), jnp.float32)

    P = adaptive_pool_crop_matrix(H, W, MIDS)      # (num_n, H*W)

    out = jax.block_until_ready(gfam_forward(x, edge, params, P))
    ref = jax.block_until_ready(gfam_reference(x, edge, params, P))

    # Tolerance covers bf16 activation storage + bf16 MXU inputs (f32 accum)
    # and the approximate softmax reciprocal.
    np.testing.assert_allclose(np.asarray(out.astype(jnp.float32)),
                               np.asarray(ref), rtol=2e-2, atol=2e-2)
    print("KERNEL_OK")
</pallas_src>

<mosaic_0001>
module attributes {stable_mosaic.version = 11 : i64} {
  func.func @gfam_kernel(%arg0: i32, %arg1: memref<1x32x256xbf16, #tpu.memory_space<vmem>>, %arg2: memref<1x2x256xbf16, #tpu.memory_space<vmem>>, %arg3: memref<16x256xbf16, #tpu.memory_space<vmem>>, %arg4: memref<32x32xbf16, #tpu.memory_space<vmem>>, %arg5: memref<32x1xf32, #tpu.memory_space<vmem>>, %arg6: memref<16x16xbf16, #tpu.memory_space<vmem>>, %arg7: memref<1x16xf32, #tpu.memory_space<vmem>>, %arg8: memref<16x16xbf16, #tpu.memory_space<vmem>>, %arg9: memref<32x16xbf16, #tpu.memory_space<vmem>>, %arg10: memref<1x32x256xbf16, #tpu.memory_space<vmem>>) attributes {dimension_semantics = [#tpu.dimension_semantics<parallel>], iteration_bounds = array<i64: 2>, scalar_prefetch = 0 : i64, scratch_operands = 0 : i64, tpu.core_type = #tpu.core_type<tc>, window_params = [{transform_indices = @transform_0, window_bounds = array<i64: 1, 32, 256>}, {transform_indices = @transform_1, window_bounds = array<i64: 1, 2, 256>}, {pipeline_mode = #tpu.pipeline_mode<synchronous>, transform_indices = @transform_2, window_bounds = array<i64: 16, 256>}, {pipeline_mode = #tpu.pipeline_mode<synchronous>, transform_indices = @transform_3, window_bounds = array<i64: 32, 32>}, {pipeline_mode = #tpu.pipeline_mode<synchronous>, transform_indices = @transform_4, window_bounds = array<i64: 32, 1>}, {pipeline_mode = #tpu.pipeline_mode<synchronous>, transform_indices = @transform_5, window_bounds = array<i64: 16, 16>}, {pipeline_mode = #tpu.pipeline_mode<synchronous>, transform_indices = @transform_6, window_bounds = array<i64: 1, 16>}, {pipeline_mode = #tpu.pipeline_mode<synchronous>, transform_indices = @transform_7, window_bounds = array<i64: 16, 16>}, {pipeline_mode = #tpu.pipeline_mode<synchronous>, transform_indices = @transform_8, window_bounds = array<i64: 32, 16>}, {transform_indices = @transform_9, window_bounds = array<i64: 1, 32, 256>}]} {
    %c0 = arith.constant 0 : index
    %c0_0 = arith.constant 0 : index
    %c0_1 = arith.constant 0 : index
    %0 = vector.load %arg1[%c0, %c0_0, %c0_1] : memref<1x32x256xbf16, #tpu.memory_space<vmem>>, vector<1x32x256xbf16>
    %1 = vector.shape_cast %0 : vector<1x32x256xbf16> to vector<32x256xbf16>
    %c0_2 = arith.constant 0 : index
    %c0_3 = arith.constant 0 : index
    %c0_4 = arith.constant 0 : index
    %2 = vector.load %arg2[%c0_2, %c0_3, %c0_4] : memref<1x2x256xbf16, #tpu.memory_space<vmem>>, vector<1x2x256xbf16>
    %3 = vector.shape_cast %2 : vector<1x2x256xbf16> to vector<2x256xbf16>
    %4 = arith.extf %3 : vector<2x256xbf16> to vector<2x256xf32>
    %5 = vector.extract_strided_slice %4 {offsets = [1, 0], sizes = [1, 256], strides = [1, 1]} : vector<2x256xf32> to vector<1x256xf32>
    %6 = vector.extract_strided_slice %4 {offsets = [0, 0], sizes = [1, 256], strides = [1, 1]} : vector<2x256xf32> to vector<1x256xf32>
    %7 = arith.subf %5, %6 : vector<1x256xf32>
    %8 = arith.negf %7 : vector<1x256xf32>
    %9 = math.exp %8 : vector<1x256xf32>
    %cst = arith.constant 1.000000e+00 : f32
    %10 = vector.broadcast %cst : f32 to vector<1x256xf32>
    %11 = arith.addf %10, %9 : vector<1x256xf32>
    %12 = arith.divf %10, %11 : vector<1x256xf32>
    %c0_5 = arith.constant 0 : index
    %c0_6 = arith.constant 0 : index
    %13 = vector.load %arg4[%c0_5, %c0_6] : memref<32x32xbf16, #tpu.memory_space<vmem>>, vector<32x32xbf16>
    %cst_7 = arith.constant dense<0.000000e+00> : vector<32x256xf32>
    %14 = tpu.matmul %13, %1, %cst_7 {dimension_numbers = #tpu.dot_dimension_numbers<[1], [0], [0], [1], [0, 0, 1, 1], [], []>} : vector<32x32xbf16>, vector<32x256xbf16>, vector<32x256xf32> -> vector<32x256xf32>
    %c0_8 = arith.constant 0 : index
    %c0_9 = arith.constant 0 : index
    %15 = vector.load %arg5[%c0_8, %c0_9] : memref<32x1xf32, #tpu.memory_space<vmem>>, vector<32x1xf32>
    %16 = vector.broadcast %15 : vector<32x1xf32> to vector<32x256xf32>
    %17 = arith.addf %14, %16 : vector<32x256xf32>
    %18 = vector.extract_strided_slice %17 {offsets = [0, 0], sizes = [16, 256], strides = [1, 1]} : vector<32x256xf32> to vector<16x256xf32>
    %19 = vector.extract_strided_slice %17 {offsets = [16, 0], sizes = [16, 256], strides = [1, 1]} : vector<32x256xf32> to vector<16x256xf32>
    %20 = vector.broadcast %12 : vector<1x256xf32> to vector<16x256xf32>
    %21 = arith.mulf %19, %20 : vector<16x256xf32>
    %22 = arith.truncf %21 : vector<16x256xf32> to vector<16x256xbf16>
    %c0_10 = arith.constant 0 : index
    %c0_11 = arith.constant 0 : index
    %23 = vector.load %arg3[%c0_10, %c0_11] : memref<16x256xbf16, #tpu.memory_space<vmem>>, vector<16x256xbf16>
    %cst_12 = arith.constant dense<0.000000e+00> : vector<16x16xf32>
    %24 = tpu.matmul %22, %23, %cst_12 {dimension_numbers = #tpu.dot_dimension_numbers<[1], [1], [0], [0], [0, 0, 1, 0], [], []>} : vector<16x256xbf16>, vector<16x256xbf16>, vector<16x16xf32> -> vector<16x16xf32>
    %25 = arith.truncf %24 : vector<16x16xf32> to vector<16x16xbf16>
    %26 = arith.truncf %19 : vector<16x256xf32> to vector<16x256xbf16>
    %cst_13 = arith.constant dense<0.000000e+00> : vector<16x256xf32>
    %27 = tpu.matmul %25, %26, %cst_13 {dimension_numbers = #tpu.dot_dimension_numbers<[0], [0], [1], [1], [0, 1, 1, 1], [], []>} : vector<16x16xbf16>, vector<16x256xbf16>, vector<16x256xf32> -> vector<16x256xf32>
    %cst_14 = arith.constant dense<0xFF800000> : vector<256xf32>
    %28 = vector.multi_reduction <maximumf>, %27, %cst_14 [0] : vector<16x256xf32> to vector<256xf32>
    %29 = vector.shape_cast %28 : vector<256xf32> to vector<1x256xf32>
    %30 = vector.broadcast %29 : vector<1x256xf32> to vector<16x256xf32>
    %31 = arith.subf %27, %30 : vector<16x256xf32>
    %32 = math.exp %31 : vector<16x256xf32>
    %cst_15 = arith.constant dense<0.000000e+00> : vector<256xf32>
    %33 = vector.multi_reduction <add>, %32, %cst_15 [0] : vector<16x256xf32> to vector<256xf32>
    %34 = vector.shape_cast %33 : vector<256xf32> to vector<1x256xf32>
    %35 = tpu.reciprocal %34 {approx = true} : vector<1x256xf32> -> vector<1x256xf32>
    %36 = vector.broadcast %35 : vector<1x256xf32> to vector<16x256xf32>
    %37 = arith.mulf %32, %36 : vector<16x256xf32>
    %38 = arith.truncf %37 : vector<16x256xf32> to vector<16x256xbf16>
    %39 = arith.truncf %18 : vector<16x256xf32> to vector<16x256xbf16>
    %cst_16 = arith.constant dense<0.000000e+00> : vector<16x16xf32>
    %40 = tpu.matmul %39, %38, %cst_16 {dimension_numbers = #tpu.dot_dimension_numbers<[1], [1], [0], [0], [0, 0, 1, 0], [], []>} : vector<16x256xbf16>, vector<16x256xbf16>, vector<16x16xf32> -> vector<16x16xf32>
    %41 = arith.truncf %40 : vector<16x16xf32> to vector<16x16xbf16>
    %c0_17 = arith.constant 0 : index
    %c0_18 = arith.constant 0 : index
    %42 = vector.load %arg6[%c0_17, %c0_18] : memref<16x16xbf16, #tpu.memory_space<vmem>>, vector<16x16xbf16>
    %cst_19 = arith.constant dense<0.000000e+00> : vector<16x16xf32>
    %43 = tpu.matmul %41, %42, %cst_19 {dimension_numbers = #tpu.dot_dimension_numbers<[1], [0], [0], [1], [0, 0, 1, 1], [], []>} : vector<16x16xbf16>, vector<16x16xbf16>, vector<16x16xf32> -> vector<16x16xf32>
    %c0_20 = arith.constant 0 : index
    %c0_21 = arith.constant 0 : index
    %44 = vector.load %arg7[%c0_20, %c0_21] : memref<1x16xf32, #tpu.memory_space<vmem>>, vector<1x16xf32>
    %45 = vector.broadcast %44 : vector<1x16xf32> to vector<16x16xf32>
    %46 = arith.addf %43, %45 : vector<16x16xf32>
    %47 = arith.subf %46, %40 : vector<16x16xf32>
    %c0_22 = arith.constant 0 : index
    %c0_23 = arith.constant 0 : index
    %48 = vector.load %arg8[%c0_22, %c0_23] : memref<16x16xbf16, #tpu.memory_space<vmem>>, vector<16x16xbf16>
    %49 = arith.truncf %47 : vector<16x16xf32> to vector<16x16xbf16>
    %cst_24 = arith.constant dense<0.000000e+00> : vector<16x16xf32>
    %50 = tpu.matmul %48, %49, %cst_24 {dimension_numbers = #tpu.dot_dimension_numbers<[1], [0], [0], [1], [0, 0, 1, 1], [], []>} : vector<16x16xbf16>, vector<16x16xbf16>, vector<16x16xf32> -> vector<16x16xf32>
    %cst_25 = arith.constant 0.000000e+00 : f32
    %51 = vector.broadcast %cst_25 : f32 to vector<16x16xf32>
    %52 = arith.maximumf %50, %51 : vector<16x16xf32>
    %c0_26 = arith.constant 0 : index
    %c0_27 = arith.constant 0 : index
    %53 = vector.load %arg9[%c0_26, %c0_27] : memref<32x16xbf16, #tpu.memory_space<vmem>>, vector<32x16xbf16>
    %54 = arith.truncf %52 : vector<16x16xf32> to vector<16x16xbf16>
    %cst_28 = arith.constant dense<0.000000e+00> : vector<32x16xf32>
    %55 = tpu.matmul %53, %54, %cst_28 {dimension_numbers = #tpu.dot_dimension_numbers<[1], [0], [0], [1], [0, 0, 1, 1], [], []>} : vector<32x16xbf16>, vector<16x16xbf16>, vector<32x16xf32> -> vector<32x16xf32>
    %56 = arith.truncf %55 : vector<32x16xf32> to vector<32x16xbf16>
    %cst_29 = arith.constant dense<0.000000e+00> : vector<32x256xf32>
    %57 = tpu.matmul %56, %38, %cst_29 {dimension_numbers = #tpu.dot_dimension_numbers<[1], [0], [0], [1], [0, 0, 1, 1], [], []>} : vector<32x16xbf16>, vector<16x256xbf16>, vector<32x256xf32> -> vector<32x256xf32>
    %58 = arith.extf %1 : vector<32x256xbf16> to vector<32x256xf32>
    %59 = arith.addf %58, %57 : vector<32x256xf32>
    %60 = arith.truncf %59 : vector<32x256xf32> to vector<32x256xbf16>
    %c0_30 = arith.constant 0 : index
    %c0_31 = arith.constant 0 : index
    %c0_32 = arith.constant 0 : index
    %61 = vector.load %arg10[%c0_30, %c0_31, %c0_32] : memref<1x32x256xbf16, #tpu.memory_space<vmem>>, vector<1x32x256xbf16>
    %62 = vector.shape_cast %61 : vector<1x32x256xbf16> to vector<32x256xbf16>
    %63 = vector.shape_cast %60 : vector<32x256xbf16> to vector<1x32x256xbf16>
    tpu.vector_store %arg10[%c0_30, %c0_31, %c0_32], %63 {strides = array<i32>} : memref<1x32x256xbf16, #tpu.memory_space<vmem>>, vector<1x32x256xbf16>,
    return
  }
  func.func @transform_0(%arg0: i32) -> (i32, i32, i32) {
    %c0_i32 = arith.constant 0 : i32
    %c0_i32_0 = arith.constant 0 : i32
    %c0_i32_1 = arith.constant 0 : i32
    return %arg0, %c0_i32, %c0_i32_0 : i32, i32, i32
  }
  func.func @transform_1(%arg0: i32) -> (i32, i32, i32) {
    %c0_i32 = arith.constant 0 : i32
    %c0_i32_0 = arith.constant 0 : i32
    %c0_i32_1 = arith.constant 0 : i32
    return %arg0, %c0_i32, %c0_i32_0 : i32, i32, i32
  }
  func.func @transform_2(%arg0: i32) -> (i32, i32) {
    %c0_i32 = arith.constant 0 : i32
    %c0_i32_0 = arith.constant 0 : i32
    %c0_i32_1 = arith.constant 0 : i32
    return %c0_i32, %c0_i32_0 : i32, i32
  }
  func.func @transform_3(%arg0: i32) -> (i32, i32) {
    %c0_i32 = arith.constant 0 : i32
    %c0_i32_0 = arith.constant 0 : i32
    %c0_i32_1 = arith.constant 0 : i32
    return %c0_i32, %c0_i32_0 : i32, i32
  }
  func.func @transform_4(%arg0: i32) -> (i32, i32) {
    %c0_i32 = arith.constant 0 : i32
    %c0_i32_0 = arith.constant 0 : i32
    %c0_i32_1 = arith.constant 0 : i32
    return %c0_i32, %c0_i32_0 : i32, i32
  }
  func.func @transform_5(%arg0: i32) -> (i32, i32) {
    %c0_i32 = arith.constant 0 : i32
    %c0_i32_0 = arith.constant 0 : i32
    %c0_i32_1 = arith.constant 0 : i32
    return %c0_i32, %c0_i32_0 : i32, i32
  }
  func.func @transform_6(%arg0: i32) -> (i32, i32) {
    %c0_i32 = arith.constant 0 : i32
    %c0_i32_0 = arith.constant 0 : i32
    %c0_i32_1 = arith.constant 0 : i32
    return %c0_i32, %c0_i32_0 : i32, i32
  }
  func.func @transform_7(%arg0: i32) -> (i32, i32) {
    %c0_i32 = arith.constant 0 : i32
    %c0_i32_0 = arith.constant 0 : i32
    %c0_i32_1 = arith.constant 0 : i32
    return %c0_i32, %c0_i32_0 : i32, i32
  }
  func.func @transform_8(%arg0: i32) -> (i32, i32) {
    %c0_i32 = arith.constant 0 : i32
    %c0_i32_0 = arith.constant 0 : i32
    %c0_i32_1 = arith.constant 0 : i32
    return %c0_i32, %c0_i32_0 : i32, i32
  }
  func.func @transform_9(%arg0: i32) -> (i32, i32, i32) {
    %c0_i32 = arith.constant 0 : i32
    %c0_i32_0 = arith.constant 0 : i32
    %c0_i32_1 = arith.constant 0 : i32
    return %arg0, %c0_i32, %c0_i32_0 : i32, i32, i32
  }
}

</mosaic_0001>

<llo_original>
// kernel: gfam_forward.1
$region0: #{gfam_forward.1}
  #allocation0 [shape = 'u32[]', space=smem, size = 0x4, offset = 0x4, fixed_abs, tag = 'smem constant byte address 0x4 - core index']
  #allocation1 [shape = 'u32[144,128]{1,0:T(1,128)}', space=vmem, size = 0x12000, scoped, tag = 'internal scratch']
  %s0 = inlined_call_operand.vmem [shape: bf16[2,32,256], index: 0, kind: input, shape index: {}, may-alias: {0,9}]
  %s1 = inlined_call_operand.vmem [shape: bf16[2,2,256], index: 1, kind: input, shape index: {}]
  %s2 = inlined_call_operand.vmem [shape: bf16[16,256], index: 2, kind: input, shape index: {}]
  %s3 = inlined_call_operand.vmem [shape: bf16[32,32], index: 3, kind: input, shape index: {}]
  %s4 = inlined_call_operand.vmem [shape: f32[32,1], index: 4, kind: input, shape index: {}]
  %s5 = inlined_call_operand.vmem [shape: bf16[16,16], index: 5, kind: input, shape index: {}]
  %s6 = inlined_call_operand.vmem [shape: f32[1,16], index: 6, kind: input, shape index: {}]
  %s7 = inlined_call_operand.vmem [shape: bf16[16,16], index: 7, kind: input, shape index: {}]
  %s8 = inlined_call_operand.vmem [shape: bf16[32,16], index: 8, kind: input, shape index: {}]
  %s9 = inlined_call_operand.vmem [shape: bf16[2,32,256], index: 9, kind: output, shape index: {}, may-alias: {0,9}]
  %s10 = sld [smem:[#allocation0]]
  $region69: #{gfam_forward.1} parent=0
    _
  %s12 = ssub.s32 1, %s10
  %s13 = scalar_select 0, %s12, %s10
  loop: start=0, step=1, limit=4
  $region2: #{gfam_forward.1} parent=0 // loop_pre_header
    _
  $region3: #{gfam_forward.1} parent=0 // loop_header
    %s15 = sphi 0, %s19
    %p16 = scmp.ge.s32.totalorder %s15, 4
    %s25 = sphi 0, %s27
    %s28 = sphi 0, %s25
    %s29 = sphi 0, %s28
    %s45 = sphi 0, %s29
    %s51 = sphi 0, %s53
    %s54 = sphi 0, %s51
    %s55 = sphi 0, %s54
    %s71 = sphi 0, %s55
    %s75 = sphi 0, %s75
    %s77 = sphi 0, %s75
    %s78 = sphi 0, %s77
    %s92 = sphi 0, %s78
    %s96 = sphi 0, %s96
    %s98 = sphi 0, %s96
    %s99 = sphi 0, %s98
    %s113 = sphi 0, %s99
    %s117 = sphi 0, %s117
    %s119 = sphi 0, %s117
    %s120 = sphi 0, %s119
    %s134 = sphi 0, %s120
    %s138 = sphi 0, %s138
    %s140 = sphi 0, %s138
    %s141 = sphi 0, %s140
    %s155 = sphi 0, %s141
    %s159 = sphi 0, %s159
    %s161 = sphi 0, %s159
    %s162 = sphi 0, %s161
    %s176 = sphi 0, %s162
    %s180 = sphi 0, %s180
    %s182 = sphi 0, %s180
    %s183 = sphi 0, %s182
    %s197 = sphi 0, %s183
    %s201 = sphi 0, %s201
    %s203 = sphi 0, %s201
    %s204 = sphi 0, %s203
    %s218 = sphi 0, %s204
    %s224 = sphi 0, %s226
    %s227 = sphi 0, %s224
    %s228 = sphi 0, %s227
    %s244 = sphi 0, %s228
  $region4: #{gfam_forward.1} parent=0 // loop_header_branch
    %18 = sbr.rel (%p16) target = $region8
  $region5: #{gfam_forward.1} parent=0 // loop_body
    %s20 = ssub.s32 %s15, 1
    %s21 = ssub.s32 %s15, 2
    %s22 = sadd.s32 %s15, 1
    %s23 = ssub.s32 %s15, %s22
    %p24 = scmp.eq.s32.totalorder %s23, 0
    %s26 = sadd.s32 %s25, 1
    %s27 = scalar_select %p24, %s25, %s26
    %p30 = pneg %p24
    %p31 = scmp.eq.s32.totalorder %s15, 1
    %p32 = por %p30, %p31
    %p33 = scmp.ne.s32.totalorder %s25, %s28
    %p34 = scmp.eq.s32.totalorder %s15, 0
    %p35 = por %p33, %p34
    %p36 = scmp.ne.s32.totalorder %s25, %s28
    %p37 = scmp.eq.s32.totalorder %s20, 1
    %p38 = por %p36, %p37
    %p39 = scmp.ne.s32.totalorder %s28, %s29
    %p40 = scmp.eq.s32.totalorder %s20, 0
    %p41 = por %p39, %p40
    %p42 = scmp.ne.s32.totalorder %s28, %s29
    %p43 = scmp.eq.s32.totalorder %s21, 1
    %p44 = por %p42, %p43
    %p46 = scmp.ne.s32.totalorder %s29, %s45
    %p47 = scmp.eq.s32.totalorder %s21, 0
    %p48 = por %p46, %p47
    %s49 = ssub.s32 %s15, %s22
    %p50 = scmp.eq.s32.totalorder %s49, 0
    %s52 = sadd.s32 %s51, 1
    %s53 = scalar_select %p50, %s51, %s52
    %p56 = pneg %p50
    %p57 = scmp.eq.s32.totalorder %s15, 1
    %p58 = por %p56, %p57
    %p59 = scmp.ne.s32.totalorder %s51, %s54
    %p60 = scmp.eq.s32.totalorder %s15, 0
    %p61 = por %p59, %p60
    %p62 = scmp.ne.s32.totalorder %s51, %s54
    %p63 = scmp.eq.s32.totalorder %s20, 1
    %p64 = por %p62, %p63
    %p65 = scmp.ne.s32.totalorder %s54, %s55
    %p66 = scmp.eq.s32.totalorder %s20, 0
    %p67 = por %p65, %p66
    %p68 = scmp.ne.s32.totalorder %s54, %s55
    %p69 = scmp.eq.s32.totalorder %s21, 1
    %p70 = por %p68, %p69
    %p72 = scmp.ne.s32.totalorder %s55, %s71
    %p73 = scmp.eq.s32.totalorder %s21, 0
    %p74 = por %p72, %p73
    %s76 = sadd.s32 %s75, 1
    %p79 = scmp.eq.s32.totalorder %s15, 1
    %p80 = scmp.ne.s32.totalorder %s75, %s77
    %p81 = scmp.eq.s32.totalorder %s15, 0
    %p82 = por %p80, %p81
    %p83 = scmp.ne.s32.totalorder %s75, %s77
    %p84 = scmp.eq.s32.totalorder %s20, 1
    %p85 = por %p83, %p84
    %p86 = scmp.ne.s32.totalorder %s77, %s78
    %p87 = scmp.eq.s32.totalorder %s20, 0
    %p88 = por %p86, %p87
    %p89 = scmp.ne.s32.totalorder %s77, %s78
    %p90 = scmp.eq.s32.totalorder %s21, 1
    %p91 = por %p89, %p90
    %p93 = scmp.ne.s32.totalorder %s78, %s92
    %p94 = scmp.eq.s32.totalorder %s21, 0
    %p95 = por %p93, %p94
    %s97 = sadd.s32 %s96, 1
    %p100 = scmp.eq.s32.totalorder %s15, 1
    %p101 = scmp.ne.s32.totalorder %s96, %s98
    %p102 = scmp.eq.s32.totalorder %s15, 0
    %p103 = por %p101, %p102
    %p104 = scmp.ne.s32.totalorder %s96, %s98
    %p105 = scmp.eq.s32.totalorder %s20, 1
    %p106 = por %p104, %p105
    %p107 = scmp.ne.s32.totalorder %s98, %s99
    %p108 = scmp.eq.s32.totalorder %s20, 0
    %p109 = por %p107, %p108
    %p110 = scmp.ne.s32.totalorder %s98, %s99
    %p111 = scmp.eq.s32.totalorder %s21, 1
    %p112 = por %p110, %p111
    %p114 = scmp.ne.s32.totalorder %s99, %s113
    %p115 = scmp.eq.s32.totalorder %s21, 0
    %p116 = por %p114, %p115
    %s118 = sadd.s32 %s117, 1
    %p121 = scmp.eq.s32.totalorder %s15, 1
    %p122 = scmp.ne.s32.totalorder %s117, %s119
    %p123 = scmp.eq.s32.totalorder %s15, 0
    %p124 = por %p122, %p123
    %p125 = scmp.ne.s32.totalorder %s117, %s119
    %p126 = scmp.eq.s32.totalorder %s20, 1
    %p127 = por %p125, %p126
    %p128 = scmp.ne.s32.totalorder %s119, %s120
    %p129 = scmp.eq.s32.totalorder %s20, 0
    %p130 = por %p128, %p129
    %p131 = scmp.ne.s32.totalorder %s119, %s120
    %p132 = scmp.eq.s32.totalorder %s21, 1
    %p133 = por %p131, %p132
    %p135 = scmp.ne.s32.totalorder %s120, %s134
    %p136 = scmp.eq.s32.totalorder %s21, 0
    %p137 = por %p135, %p136
    %s139 = sadd.s32 %s138, 1
    %p142 = scmp.eq.s32.totalorder %s15, 1
    %p143 = scmp.ne.s32.totalorder %s138, %s140
    %p144 = scmp.eq.s32.totalorder %s15, 0
    %p145 = por %p143, %p144
    %p146 = scmp.ne.s32.totalorder %s138, %s140
    %p147 = scmp.eq.s32.totalorder %s20, 1
    %p148 = por %p146, %p147
    %p149 = scmp.ne.s32.totalorder %s140, %s141
    %p150 = scmp.eq.s32.totalorder %s20, 0
    %p151 = por %p149, %p150
    %p152 = scmp.ne.s32.totalorder %s140, %s141
    %p153 = scmp.eq.s32.totalorder %s21, 1
    %p154 = por %p152, %p153
    %p156 = scmp.ne.s32.totalorder %s141, %s155
    %p157 = scmp.eq.s32.totalorder %s21, 0
    %p158 = por %p156, %p157
    %s160 = sadd.s32 %s159, 1
    %p163 = scmp.eq.s32.totalorder %s15, 1
    %p164 = scmp.ne.s32.totalorder %s159, %s161
    %p165 = scmp.eq.s32.totalorder %s15, 0
    %p166 = por %p164, %p165
    %p167 = scmp.ne.s32.totalorder %s159, %s161
    %p168 = scmp.eq.s32.totalorder %s20, 1
    %p169 = por %p167, %p168
    %p170 = scmp.ne.s32.totalorder %s161, %s162
    %p171 = scmp.eq.s32.totalorder %s20, 0
    %p172 = por %p170, %p171
    %p173 = scmp.ne.s32.totalorder %s161, %s162
    %p174 = scmp.eq.s32.totalorder %s21, 1
    %p175 = por %p173, %p174
    %p177 = scmp.ne.s32.totalorder %s162, %s176
    %p178 = scmp.eq.s32.totalorder %s21, 0
    %p179 = por %p177, %p178
    %s181 = sadd.s32 %s180, 1
    %p184 = scmp.eq.s32.totalorder %s15, 1
    %p185 = scmp.ne.s32.totalorder %s180, %s182
    %p186 = scmp.eq.s32.totalorder %s15, 0
    %p187 = por %p185, %p186
    %p188 = scmp.ne.s32.totalorder %s180, %s182
    %p189 = scmp.eq.s32.totalorder %s20, 1
    %p190 = por %p188, %p189
    %p191 = scmp.ne.s32.totalorder %s182, %s183
    %p192 = scmp.eq.s32.totalorder %s20, 0
    %p193 = por %p191, %p192
    %p194 = scmp.ne.s32.totalorder %s182, %s183
    %p195 = scmp.eq.s32.totalorder %s21, 1
    %p196 = por %p194, %p195
    %p198 = scmp.ne.s32.totalorder %s183, %s197
    %p199 = scmp.eq.s32.totalorder %s21, 0
    %p200 = por %p198, %p199
    %s202 = sadd.s32 %s201, 1
    %p205 = scmp.eq.s32.totalorder %s15, 1
    %p206 = scmp.ne.s32.totalorder %s201, %s203
    %p207 = scmp.eq.s32.totalorder %s15, 0
    %p208 = por %p206, %p207
    %p209 = scmp.ne.s32.totalorder %s201, %s203
    %p210 = scmp.eq.s32.totalorder %s20, 1
    %p211 = por %p209, %p210
    %p212 = scmp.ne.s32.totalorder %s203, %s204
    %p213 = scmp.eq.s32.totalorder %s20, 0
    %p214 = por %p212, %p213
    %p215 = scmp.ne.s32.totalorder %s203, %s204
    %p216 = scmp.eq.s32.totalorder %s21, 1
    %p217 = por %p215, %p216
    %p219 = scmp.ne.s32.totalorder %s204, %s218
    %p220 = scmp.eq.s32.totalorder %s21, 0
    %p221 = por %p219, %p220
    %s222 = ssub.s32 %s15, %s22
    %p223 = scmp.eq.s32.totalorder %s222, 0
    %s225 = sadd.s32 %s224, 1
    %s226 = scalar_select %p223, %s224, %s225
    %p229 = pneg %p223
    %p230 = scmp.eq.s32.totalorder %s15, 1
    %p231 = por %p229, %p230
    %p232 = scmp.ne.s32.totalorder %s224, %s227
    %p233 = scmp.eq.s32.totalorder %s15, 0
    %p234 = por %p232, %p233
    %p235 = scmp.ne.s32.totalorder %s224, %s227
    %p236 = scmp.eq.s32.totalorder %s20, 1
    %p237 = por %p235, %p236
    %p238 = scmp.ne.s32.totalorder %s227, %s228
    %p239 = scmp.eq.s32.totalorder %s20, 0
    %p240 = por %p238, %p239
    %p241 = scmp.ne.s32.totalorder %s227, %s228
    %p242 = scmp.eq.s32.totalorder %s21, 1
    %p243 = por %p241, %p242
    %p245 = scmp.ne.s32.totalorder %s228, %s244
    %p246 = scmp.eq.s32.totalorder %s21, 0
    %p247 = por %p245, %p246
    %p248 = scmp.le.s32.totalorder 1, %s15
    %p249 = scmp.lt.s32.totalorder %s15, 3
    %p250 = pnand %p248, %p249
    %p251 = pneg %p250
    // Predicated region
    $region9: #{gfam_forward.1} parent=5 // pred_check
      _
    $region10: #{gfam_forward.1} parent=5 // pred_check_branch
      %253 = sbr.rel (%p250) target = $region12
    $region11: #{gfam_forward.1} parent=5 // pred_region
      %s254 = ssub.s32 %s15, 1
      // Predicated region
      $region13: #{gfam_forward.1} parent=11 // pred_check
        %p255 = pneg %p88
      $region14: #{gfam_forward.1} parent=11 // pred_check_branch
        %257 = sbr.rel (%p255) target = $region16
      $region15: #{gfam_forward.1} parent=11 // pred_region
        _
      $region16: #{gfam_forward.1} parent=11 // pred_fallthru
        _
      // Predicated region
      $region17: #{gfam_forward.1} parent=11 // pred_check
        %p258 = pneg %p109
      $region18: #{gfam_forward.1} parent=11 // pred_check_branch
        %260 = sbr.rel (%p258) target = $region20
      $region19: #{gfam_forward.1} parent=11 // pred_region
        _
      $region20: #{gfam_forward.1} parent=11 // pred_fallthru
        _
      // Predicated region
      $region21: #{gfam_forward.1} parent=11 // pred_check
        %p261 = pneg %p130
      $region22: #{gfam_forward.1} parent=11 // pred_check_branch
        %263 = sbr.rel (%p261) target = $region24
      $region23: #{gfam_forward.1} parent=11 // pred_region
        _
      $region24: #{gfam_forward.1} parent=11 // pred_fallthru
        _
      // Predicated region
      $region25: #{gfam_forward.1} parent=11 // pred_check
        %p264 = pneg %p151
      $region26: #{gfam_forward.1} parent=11 // pred_check_branch
        %266 = sbr.rel (%p264) target = $region28
      $region27: #{gfam_forward.1} parent=11 // pred_region
        _
      $region28: #{gfam_forward.1} parent=11 // pred_fallthru
        _
      // Predicated region
      $region29: #{gfam_forward.1} parent=11 // pred_check
        %p267 = pneg %p172
      $region30: #{gfam_forward.1} parent=11 // pred_check_branch
        %269 = sbr.rel (%p267) target = $region32
      $region31: #{gfam_forward.1} parent=11 // pred_region
        _
      $region32: #{gfam_forward.1} parent=11 // pred_fallthru
        _
      // Predicated region
      $region33: #{gfam_forward.1} parent=11 // pred_check
        %p270 = pneg %p193
      $region34: #{gfam_forward.1} parent=11 // pred_check_branch
        %272 = sbr.rel (%p270) target = $region36
      $region35: #{gfam_forward.1} parent=11 // pred_region
        _
      $region36: #{gfam_forward.1} parent=11 // pred_fallthru
        _
      // Predicated region
      $region37: #{gfam_forward.1} parent=11 // pred_check
        %p273 = pneg %p214
      $region38: #{gfam_forward.1} parent=11 // pred_check_branch
        %275 = sbr.rel (%p273) target = $region40
      $region39: #{gfam_forward.1} parent=11 // pred_region
        _
      $region40: #{gfam_forward.1} parent=11 // pred_fallthru
        _
    $region12: #{gfam_forward.1} parent=5 // pred_fallthru
      _
    %p276 = scmp.lt.s32.totalorder %s15, 2
    // Predicated region
    $region41: #{gfam_forward.1} parent=5 // pred_check
      %p277 = pneg %p276
    $region42: #{gfam_forward.1} parent=5 // pred_check_branch
      %279 = sbr.rel (%p277) target = $region44
    $region43: #{gfam_forward.1} parent=5 // pred_region
      // Predicated region
      $region45: #{gfam_forward.1} parent=43 // pred_check
        %p280 = pneg %p35
      $region46: #{gfam_forward.1} parent=43 // pred_check_branch
        %282 = sbr.rel (%p280) target = $region48
      $region47: #{gfam_forward.1} parent=43 // pred_region
        %p283 = scmp.lt.s32.totalorder %s15, 1
        %s284 = scalar_select %p283, %s15, 1
        %s285 = smul.addr %s284, 8
        %s286 = smul.addr %s285, 4
        %s287 = scalar_lea.vmem %s0, %s286
      $region48: #{gfam_forward.1} parent=43 // pred_fallthru
        _
      // Predicated region
      $region49: #{gfam_forward.1} parent=43 // pred_check
        %p288 = pneg %p61
      $region50: #{gfam_forward.1} parent=43 // pred_check_branch
        %290 = sbr.rel (%p288) target = $region52
      $region51: #{gfam_forward.1} parent=43 // pred_region
        %p291 = scmp.lt.s32.totalorder %s15, 1
        %s292 = scalar_select %p291, %s15, 1
        %s293 = smul.addr %s292, 2
        %s294 = scalar_lea.vmem %s1, %s293
      $region52: #{gfam_forward.1} parent=43 // pred_fallthru
        _
    $region44: #{gfam_forward.1} parent=5 // pred_fallthru
      _
    %p295 = scmp.le.s32.totalorder 1, %s15
    %p296 = scmp.lt.s32.totalorder %s15, 3
    %p297 = pnand %p295, %p296
    %p298 = pneg %p297
    // Predicated region
    $region53: #{gfam_forward.1} parent=5 // pred_check
      _
    $region54: #{gfam_forward.1} parent=5 // pred_check_branch
      %300 = sbr.rel (%p297) target = $region56
    $region55: #{gfam_forward.1} parent=5 // pred_region
      %s301 = ssub.s32 %s15, 1
      %p302 = scmp.lt.s32.totalorder %s20, 1
      %s303 = scalar_select %p302, %s20, 1
      %s304 = smul.addr %s303, 8
      %s305 = smul.addr %s304, 4
      %s306 = scalar_lea.vmem %s0, %s305
      %p307 = pneg %p41
      %p308 = pneg %p38
      %p309 = scmp.lt.s32.totalorder %s20, 1
      %s310 = scalar_select %p309, %s20, 1
      %s311 = smul.addr %s310, 2
      %s312 = scalar_lea.vmem %s1, %s311
      %p313 = pneg %p67
      %p314 = pneg %p64
      %p315 = pneg %p88
      %p316 = pneg %p85
      %p317 = pneg %p109
      %p318 = pneg %p106
      %p319 = pneg %p130
      %p320 = pneg %p127
      %p321 = pneg %p151
      %p322 = pneg %p148
      %p323 = pneg %p172
      %p324 = pneg %p169
      %p325 = pneg %p193
      %p326 = pneg %p190
      %p327 = pneg %p214
      %p328 = pneg %p211
      %p329 = pneg %p240
      %p330 = pneg %p237
      %p331 = scmp.lt.s32.totalorder %s20, 1
      %s332 = scalar_select %p331, %s20, 1
      %s333 = smul.addr %s332, 8
      %s334 = smul.addr %s333, 4
      %s335 = scalar_lea.vmem %s9, %s334
      %p336 = scmp.lt.s32.totalorder %s20, 1
      %s337 = scalar_select %p336, %s20, 1
      %s338 = smul.addr %s337, 8
      %s339 = smul.addr %s338, 4
      %s340 = scalar_lea.vmem %s0, %s339
      %p341 = scmp.lt.s32.totalorder %s20, 1
      %s342 = scalar_select %p341, %s20, 1
      %s343 = smul.addr %s342, 2
      %s344 = scalar_lea.vmem %s1, %s343
      %p345 = scmp.lt.s32.totalorder %s20, 1
      %s346 = scalar_select %p345, %s20, 1
      %s347 = smul.addr %s346, 8
      %s348 = smul.addr %s347, 4
      %s349 = scalar_lea.vmem %s9, %s348
      %v351 = vld [vmem:[%s340] sm:$0xff]
      %v352 = vld [vmem:[%s340 + $0x8] sm:$0xff]
      %v353 = vld [vmem:[%s340 + $0x10] sm:$0xff]
      %v354 = vld [vmem:[%s340 + $0x18] sm:$0xff]
      %v355 = vld [vmem:[%s344] sm:$0x3]
      %v356 = vunpack.c.l.bf16 %v355
      %v358 = vrot.slane %v356, 7
      %v360 = vsub.f32 %v356, %v358
      %v361 = vxor.u32 %v360, 2147483648
      %v362 = vmul.f32 %v361, 1.442695
      %v363 = vpow.pop %v362
      %v364 = vadd.f32 %v363, 1.0
      %v365 = vrcp.pop %v364
      %v366 = vmul.f32 1.0, %v365
      %v367 = vld [vmem:[%s3] sm:$0xf]
      %v368 = vld [vmem:[%s3 + $0x4] sm:$0xf]
      %v369 = vld [vmem:[%s3 + $0x8] sm:$0xf]
      %v370 = vld [vmem:[%s3 + $0xc] sm:$0xf]
      %v371 = vld [vmem:[%s4] sm:$0xff]
      %v372 = vld [vmem:[%s4 + $0x8] sm:$0xff]
      %v373 = vld [vmem:[%s4 + $0x10] sm:$0xff]
      %v374 = vld [vmem:[%s4 + $0x18] sm:$0xff]
      %376 = vset.pattern.permute.xlu0 0
      %377 = vperm.xlu0 %376, %v371
      %v378 = vpop.permute.xlu0 %377
      %381 = vset.pattern.permute.xlu0 0
      %382 = vperm.xlu0 %381, %v372
      %v383 = vpop.permute.xlu0 %382
      %386 = vset.pattern.permute.xlu0 0
      %387 = vperm.xlu0 %386, %v373
      %v388 = vpop.permute.xlu0 %387
      %391 = vset.pattern.permute.xlu0 0
      %392 = vperm.xlu0 %391, %v374
      %v393 = vpop.permute.xlu0 %392
      %v399 = vunpack.c.l.b16 %v367
      %v400 = vunpack.c.l.b16 %v368
      %v401 = vunpack.c.l.b16 %v369
      %v402 = vunpack.c.l.b16 %v370
      %v403 = vpack.c.b16 %v400, %v399
      %v404 = vpack.c.b16 %v402, %v401
      %v409 = vunpack.c.l.b16 %v351
      %v410 = vunpack.c.h.b16 %v351
      %v411 = vunpack.c.l.b16 %v352
      %v412 = vunpack.c.h.b16 %v352
      %v413 = vunpack.c.l.b16 %v353
      %v414 = vunpack.c.h.b16 %v353
      %v415 = vunpack.c.l.b16 %v354
      %v416 = vunpack.c.h.b16 %v354
      %v417 = vpack.c.b16 %v411, %v409
      %v418 = vpack.c.b16 %v412, %v410
      %v419 = vpack.c.b16 %v415, %v413
      %v420 = vpack.c.b16 %v416, %v414
      %vm425 = vcmask 261120
      %v427 = vsel %vm425, %v403, 0
      %v430 = vsel %vm425, %v404, 0
      %432 = vmatprep.subr.bf16.mxu0 %v418
      %433 = vmatpush1.bf16.msra.mxu0 %v417
      %434 = vmatprep.subr.bf16.mxu0 %v420
      %435 = vmatpush1.bf16.msra.mxu0 %v419
      %436 = vmatprep.subr.bf16.mxu0 0
      %437 = vmatpush1.bf16.msra.mxu0 0
      %438 = vmatprep.subr.bf16.mxu0 0
      %439 = vmatpush1.bf16.msra.mxu0 0
      %440 = vmatprep.subr.bf16.mxu0 0
      %441 = vmatpush1.bf16.msra.mxu0 0
      %442 = vmatprep.subr.bf16.mxu0 0
      %443 = vmatpush1.bf16.msra.mxu0 0
      %444 = vmatprep.subr.bf16.mxu0 0
      %445 = vmatpush1.bf16.msra.mxu0 0
      %446 = vmatprep.subr.bf16.mxu0 0
      %447 = vmatpush1.bf16.msra.mxu0 0
      %448 = vmatprep.subr.bf16.mxu0 0
      %449 = vmatpush1.bf16.msra.mxu0 0
      %450 = vmatprep.subr.bf16.mxu0 0
      %451 = vmatpush1.bf16.msra.mxu0 0
      %452 = vmatprep.subr.bf16.mxu0 0
      %453 = vmatpush1.bf16.msra.mxu0 0
      %454 = vmatprep.subr.bf16.mxu0 0
      %455 = vmatpush1.bf16.msra.mxu0 0
      %456 = vmatprep.subr.bf16.mxu0 0
      %457 = vmatpush1.bf16.msra.mxu0 0
      %458 = vmatprep.subr.bf16.mxu0 0
      %459 = vmatpush1.bf16.msra.mxu0 0
      %460 = vmatprep.subr.bf16.mxu0 0
      %461 = vmatpush1.bf16.msra.mxu0 0
      %462 = vmatprep.subr.bf16.mxu0 0
      %463 = vmatpush1.bf16.msra.mxu0 0
      %464 = vmatprep.mubr.bf16.mxu0 0
      %465 = vmatmul.mubr.bf16.gmra.mrb[0].mxu0 %v427
      %v466 = vpop.f32.mrb[0].mxu0
      %v467 = vadd.f32 %v378, %v466
      %v468 = vpop.f32.mrb[0].mxu0
      %v469 = vadd.f32 %v378, %v468
      %v470 = vpop.f32.mrb[0].mxu0
      %v471 = vadd.f32 %v383, %v470
      %v472 = vpop.f32.mrb[0].mxu0
      %v473 = vadd.f32 %v383, %v472
      %474 = vmatprep.mubr.bf16.mxu0 0
      %475 = vmatmul.mubr.bf16.gmra.mrb[0].mxu0 %v430
      %v476 = vpop.f32.mrb[0].mxu0
      %v477 = vadd.f32 %v388, %v476
      %v478 = vpop.f32.mrb[0].mxu0
      %v479 = vadd.f32 %v388, %v478
      %v480 = vpop.f32.mrb[0].mxu0
      %v481 = vadd.f32 %v393, %v480
      %v482 = vpop.f32.mrb[0].mxu0
      %v483 = vadd.f32 %v393, %v482
      %484 = vdwg.mxu0
      %v486 = vlaneseq
      %v487 = vshrl.u32 %v486, 7
      %v488 = vsub.s32 1, %v487
      %v489 = vrot.slane %v366, %v488
      %v490 = vlaneseq
      %v491 = vshrl.u32 %v490, 7
      %v492 = vsub.s32 3, %v491
      %v493 = vrot.slane %v366, %v492
      %v496 = vlaneseq
      %v497 = vshrl.u32 %v496, 7
      %v498 = vsub.s32 1, %v497
      %v499 = vrot.slane %v489, %v498
      %v500 = vlaneseq
      %v501 = vshrl.u32 %v500, 7
      %v502 = vsub.s32 1, %v501
      %v503 = vrot.slane %v493, %v502
      %v504 = vmul.f32 %v477, %v499
      %v505 = vmul.f32 %v479, %v503
      %v506 = vmul.f32 %v481, %v499
      %v507 = vmul.f32 %v483, %v503
      %v508 = vpack.c.bf16 %v506, %v504
      %v509 = vpack.c.bf16 %v507, %v505
      %v510 = vld [vmem:[%s2] sm:$0xff]
      %v511 = vld [vmem:[%s2 + $0x8] sm:$0xff]
      %v514 = vunpack.c.l.b16 %v510
      %v515 = vunpack.c.h.b16 %v510
      %v516 = vunpack.c.l.b16 %v511
      %v517 = vunpack.c.h.b16 %v511
      %v518 = vpack.c.b16 %v516, %v514
      %v519 = vpack.c.b16 %v517, %v515
      %522 = vmatprep.subr.bf16.mxu0 %v519
      %523 = vmatpush1.bf16.xpose.msra.mxu0 %v518
      %524 = vmatprep.subr.bf16.mxu0 0
      %525 = vmatpush1.bf16.xpose.msra.mxu0 0
      %526 = vmatprep.subr.bf16.mxu0 0
      %527 = vmatpush1.bf16.xpose.msra.mxu0 0
      %528 = vmatprep.subr.bf16.mxu0 0
      %529 = vmatpush1.bf16.xpose.msra.mxu0 0
      %530 = vmatprep.subr.bf16.mxu0 0
      %531 = vmatpush1.bf16.xpose.msra.mxu0 0
      %532 = vmatprep.subr.bf16.mxu0 0
      %533 = vmatpush1.bf16.xpose.msra.mxu0 0
      %534 = vmatprep.subr.bf16.mxu0 0
      %535 = vmatpush1.bf16.xpose.msra.mxu0 0
      %536 = vmatprep.subr.bf16.mxu0 0
      %537 = vmatpush1.bf16.xpose.msra.mxu0 0
      %538 = vmatprep.subr.bf16.mxu0 0
      %539 = vmatpush1.bf16.xpose.msra.mxu0 0
      %540 = vmatprep.subr.bf16.mxu0 0
      %541 = vmatpush1.bf16.xpose.msra.mxu0 0
      %542 = vmatprep.subr.bf16.mxu0 0
      %543 = vmatpush1.bf16.xpose.msra.mxu0 0
      %544 = vmatprep.subr.bf16.mxu0 0
      %545 = vmatpush1.bf16.xpose.msra.mxu0 0
      %546 = vmatprep.subr.bf16.mxu0 0
      %547 = vmatpush1.bf16.xpose.msra.mxu0 0
      %548 = vmatprep.subr.bf16.mxu0 0
      %549 = vmatpush1.bf16.xpose.msra.mxu0 0
      %550 = vmatprep.subr.bf16.mxu0 0
      %551 = vmatpush1.bf16.xpose.msra.mxu0 0
      %552 = vmatprep.subr.bf16.mxu0 0
      %553 = vmatpush1.bf16.xpose.msra.mxu0 0
      %554 = vmatprep.mubr.bf16.mxu0 %v509
      %555 = vmatmul.mubr.bf16.gmra.mrb[0].mxu0 %v508
      %v556 = vpop.f32.mrb[0].mxu0
      %v557 = vadd.f32 0.0, %v556
      %v558 = vpop.f32.mrb[0].mxu0
      %v559 = vpop.f32.mrb[0].mxu0
      %v560 = vadd.f32 0.0, %v559
      %v561 = vpop.f32.mrb[0].mxu0
      %562 = vdwg.mxu0
      %v563 = vpack.c.bf16 %v560, %v557
      %v564 = vpack.c.bf16 %v481, %v477
      %v565 = vpack.c.bf16 %v483, %v479
      %566 = vxpose.xlu0.c.b16.start [1/8] %v563, 128
      %567 = vxpose.xlu0.c.b16.cont [2/8] 0, 128
      %568 = vxpose.xlu0.c.b16.cont [3/8] 0, 128
      %569 = vxpose.xlu0.c.b16.cont [4/8] 0, 128
      %570 = vxpose.xlu0.c.b16.cont [5/8] 0, 128
      %571 = vxpose.xlu0.c.b16.cont [6/8] 0, 128
      %572 = vxpose.xlu0.c.b16.cont [7/8] 0, 128
      %573 = vxpose.xlu0.c.b16.end [8/8] 0, 128
      %v574 = vpop.trf.xlu0
      %v575 = vpop.trf.xlu0
      %v576 = vpop.trf.xlu0
      %v577 = vpop.trf.xlu0
      %v578 = vpop.trf.xlu0
      %v579 = vpop.trf.xlu0
      %v580 = vpop.trf.xlu0
      %v581 = vpop.trf.xlu0
      %vm582 = vcmask 130048
      %v584 = vsel %vm582, %v574, 0
      %586 = vmatprep.subr.bf16.mxu0 %v565
      %587 = vmatpush1.bf16.msra.mxu0 %v564
      %588 = vmatprep.subr.bf16.mxu0 0
      %589 = vmatpush1.bf16.msra.mxu0 0
      %590 = vmatprep.subr.bf16.mxu0 0
      %591 = vmatpush1.bf16.msra.mxu0 0
      %592 = vmatprep.subr.bf16.mxu0 0
      %593 = vmatpush1.bf16.msra.mxu0 0
      %594 = vmatprep.subr.bf16.mxu0 0
      %595 = vmatpush1.bf16.msra.mxu0 0
      %596 = vmatprep.subr.bf16.mxu0 0
      %597 = vmatpush1.bf16.msra.mxu0 0
      %598 = vmatprep.subr.bf16.mxu0 0
      %599 = vmatpush1.bf16.msra.mxu0 0
      %600 = vmatprep.subr.bf16.mxu0 0
      %601 = vmatpush1.bf16.msra.mxu0 0
      %602 = vmatprep.subr.bf16.mxu0 0
      %603 = vmatpush1.bf16.msra.mxu0 0
      %604 = vmatprep.subr.bf16.mxu0 0
      %605 = vmatpush1.bf16.msra.mxu0 0
      %606 = vmatprep.subr.bf16.mxu0 0
      %607 = vmatpush1.bf16.msra.mxu0 0
      %608 = vmatprep.subr.bf16.mxu0 0
      %609 = vmatpush1.bf16.msra.mxu0 0
      %610 = vmatprep.subr.bf16.mxu0 0
      %611 = vmatpush1.bf16.msra.mxu0 0
      %612 = vmatprep.subr.bf16.mxu0 0
      %613 = vmatpush1.bf16.msra.mxu0 0
      %614 = vmatprep.subr.bf16.mxu0 0
      %615 = vmatpush1.bf16.msra.mxu0 0
      %616 = vmatprep.subr.bf16.mxu0 0
      %617 = vmatpush1.bf16.msra.mxu0 0
      %618 = vmatprep.mubr.bf16.mxu0 0
      %619 = vmatmul.mubr.bf16.gmra.mrb[0].mxu0 %v584
      %v620 = vpop.f32.mrb[0].mxu0
      %v621 = vadd.f32 0.0, %v620
      %v622 = vpop.f32.mrb[0].mxu0
      %v623 = vadd.f32 0.0, %v622
      %v624 = vpop.f32.mrb[0].mxu0
      %v625 = vadd.f32 0.0, %v624
      %v626 = vpop.f32.mrb[0].mxu0
      %v627 = vadd.f32 0.0, %v626
      %628 = vdwg.mxu0
      %v629 = vmax.f32 %v621, %v625
      %v630 = vrot.slane %v629, 4
      %v631 = vmax.f32 %v629, %v630
      %v632 = vrot.slane %v631, 2
      %v633 = vmax.f32 %v631, %v632
      %v634 = vrot.slane %v633, 1
      %v635 = vmax.f32 %v633, %v634
      %v636 = vmax.f32 %v623, %v627
      %v637 = vrot.slane %v636, 4
      %v638 = vmax.f32 %v636, %v637
      %v639 = vrot.slane %v638, 2
      %v640 = vmax.f32 %v638, %v639
      %v641 = vrot.slane %v640, 1
      %v642 = vmax.f32 %v640, %v641
      %v643 = vsub.f32 %v621, %v635
      %v644 = vsub.f32 %v623, %v642
      %v645 = vsub.f32 %v625, %v635
      %v646 = vsub.f32 %v627, %v642
      %v647 = vmul.f32 %v643, 1.442695
      %v648 = vpow.pop %v647
      %v649 = vmul.f32 %v644, 1.442695
      %v650 = vpow.pop %v649
      %v651 = vmul.f32 %v645, 1.442695
      %v652 = vpow.pop %v651
      %v653 = vmul.f32 %v646, 1.442695
      %v654 = vpow.pop %v653
      %v655 = vadd.f32 %v648, %v652
      %v656 = vrot.slane %v655, 4
      %v657 = vadd.f32 %v655, %v656
      %v658 = vrot.slane %v657, 2
      %v659 = vadd.f32 %v657, %v658
      %v660 = vrot.slane %v659, 1
      %v661 = vadd.f32 %v659, %v660
      %v662 = vadd.f32 %v650, %v654
      %v663 = vrot.slane %v662, 4
      %v664 = vadd.f32 %v662, %v663
      %v665 = vrot.slane %v664, 2
      %v666 = vadd.f32 %v664, %v665
      %v667 = vrot.slane %v666, 1
      %v668 = vadd.f32 %v666, %v667
      %v669 = vrcp.pop %v661
      %v670 = vrcp.pop %v668
      %v671 = vmul.f32 %v648, %v669
      %v672 = vmul.f32 %v650, %v670
      %v673 = vmul.f32 %v652, %v669
      %v674 = vmul.f32 %v654, %v670
      %v675 = vpack.c.bf16 %v673, %v671
      %v676 = vpack.c.bf16 %v674, %v672
      %v677 = vpack.c.bf16 %v471, %v467
      %v678 = vpack.c.bf16 %v473, %v469
      %679 = vmatprep.subr.bf16.mxu0 %v676
      %680 = vmatpush1.bf16.xpose.msra.mxu0 %v675
      %681 = vmatprep.subr.bf16.mxu0 0
      %682 = vmatpush1.bf16.xpose.msra.mxu0 0
      %683 = vmatprep.subr.bf16.mxu0 0
      %684 = vmatpush1.bf16.xpose.msra.mxu0 0
      %685 = vmatprep.subr.bf16.mxu0 0
      %686 = vmatpush1.bf16.xpose.msra.mxu0 0
      %687 = vmatprep.subr.bf16.mxu0 0
      %688 = vmatpush1.bf16.xpose.msra.mxu0 0
      %689 = vmatprep.subr.bf16.mxu0 0
      %690 = vmatpush1.bf16.xpose.msra.mxu0 0
      %691 = vmatprep.subr.bf16.mxu0 0
      %692 = vmatpush1.bf16.xpose.msra.mxu0 0
      %693 = vmatprep.subr.bf16.mxu0 0
      %694 = vmatpush1.bf16.xpose.msra.mxu0 0
      %695 = vmatprep.subr.bf16.mxu0 0
      %696 = vmatpush1.bf16.xpose.msra.mxu0 0
      %697 = vmatprep.subr.bf16.mxu0 0
      %698 = vmatpush1.bf16.xpose.msra.mxu0 0
      %699 = vmatprep.subr.bf16.mxu0 0
      %700 = vmatpush1.bf16.xpose.msra.mxu0 0
      %701 = vmatprep.subr.bf16.mxu0 0
      %702 = vmatpush1.bf16.xpose.msra.mxu0 0
      %703 = vmatprep.subr.bf16.mxu0 0
      %704 = vmatpush1.bf16.xpose.msra.mxu0 0
      %705 = vmatprep.subr.bf16.mxu0 0
      %706 = vmatpush1.bf16.xpose.msra.mxu0 0
      %707 = vmatprep.subr.bf16.mxu0 0
      %708 = vmatpush1.bf16.xpose.msra.mxu0 0
      %709 = vmatprep.subr.bf16.mxu0 0
      %710 = vmatpush1.bf16.xpose.msra.mxu0 0
      %711 = vmatprep.mubr.bf16.mxu0 %v678
      %712 = vmatmul.mubr.bf16.gmra.mrb[0].mxu0 %v677
      %v713 = vpop.f32.mrb[0].mxu0
      %v714 = vadd.f32 0.0, %v713
      %v715 = vpop.f32.mrb[0].mxu0
      %v716 = vpop.f32.mrb[0].mxu0
      %v717 = vadd.f32 0.0, %v716
      %v718 = vpop.f32.mrb[0].mxu0
      %719 = vdwg.mxu0
      %v720 = vpack.c.bf16 %v717, %v714
      %v721 = vld [vmem:[%s5] sm:$0xf]
      %v722 = vld [vmem:[%s5 + $0x4] sm:$0xf]
      %v723 = vld [vmem:[%s6] sm:$0x1]
      %v725 = vlaneseq
      %v726 = vshrl.u32 %v725, 7
      %v727 = vsub.s32 0, %v726
      %v728 = vrot.slane %v723, %v727
      %v732 = vunpack.c.l.b16 %v721
      %v733 = vunpack.c.l.b16 %v722
      %v734 = vpack.c.b16 %v733, %v732
      %v737 = vsel %vm582, %v720, 0
      %739 = vmatprep.subr.bf16.mxu0 0
      %740 = vmatpush1.bf16.msra.mxu0 %v734
      %741 = vmatprep.subr.bf16.mxu0 0
      %742 = vmatpush1.bf16.msra.mxu0 0
      %743 = vmatprep.subr.bf16.mxu0 0
      %744 = vmatpush1.bf16.msra.mxu0 0
      %745 = vmatprep.subr.bf16.mxu0 0
      %746 = vmatpush1.bf16.msra.mxu0 0
      %747 = vmatprep.subr.bf16.mxu0 0
      %748 = vmatpush1.bf16.msra.mxu0 0
      %749 = vmatprep.subr.bf16.mxu0 0
      %750 = vmatpush1.bf16.msra.mxu0 0
      %751 = vmatprep.subr.bf16.mxu0 0
      %752 = vmatpush1.bf16.msra.mxu0 0
      %753 = vmatprep.subr.bf16.mxu0 0
      %754 = vmatpush1.bf16.msra.mxu0 0
      %755 = vmatprep.subr.bf16.mxu0 0
      %756 = vmatpush1.bf16.msra.mxu0 0
      %757 = vmatprep.subr.bf16.mxu0 0
      %758 = vmatpush1.bf16.msra.mxu0 0
      %759 = vmatprep.subr.bf16.mxu0 0
      %760 = vmatpush1.bf16.msra.mxu0 0
      %761 = vmatprep.subr.bf16.mxu0 0
      %762 = vmatpush1.bf16.msra.mxu0 0
      %763 = vmatprep.subr.bf16.mxu0 0
      %764 = vmatpush1.bf16.msra.mxu0 0
      %765 = vmatprep.subr.bf16.mxu0 0
      %766 = vmatpush1.bf16.msra.mxu0 0
      %767 = vmatprep.subr.bf16.mxu0 0
      %768 = vmatpush1.bf16.msra.mxu0 0
      %769 = vmatprep.subr.bf16.mxu0 0
      %770 = vmatpush1.bf16.msra.mxu0 0
      %771 = vmatprep.mubr.bf16.mxu0 0
      %772 = vmatmul.mubr.bf16.gmra.mrb[0].mxu0 %v737
      %v773 = vpop.f32.mrb[0].mxu0
      %v774 = vadd.f32 %v728, %v773
      %v775 = vpop.f32.mrb[0].mxu0
      %v776 = vpop.f32.mrb[0].mxu0
      %v777 = vadd.f32 %v728, %v776
      %v778 = vpop.f32.mrb[0].mxu0
      %779 = vdwg.mxu0
      %v780 = vsub.f32 %v774, %v714
      %v781 = vsub.f32 %v777, %v717
      %v782 = vld [vmem:[%s7] sm:$0xf]
      %v783 = vld [vmem:[%s7 + $0x4] sm:$0xf]
      %v784 = vpack.c.bf16 %v781, %v780
      %v787 = vunpack.c.l.b16 %v782
      %v788 = vunpack.c.l.b16 %v783
      %v789 = vpack.c.b16 %v788, %v787
      %v791 = vsel %vm582, %v789, 0
      %793 = vmatprep.subr.bf16.mxu0 0
      %794 = vmatpush1.bf16.msra.mxu0 %v784
      %795 = vmatprep.subr.bf16.mxu0 0
      %796 = vmatpush1.bf16.msra.mxu0 0
      %797 = vmatprep.subr.bf16.mxu0 0
      %798 = vmatpush1.bf16.msra.mxu0 0
      %799 = vmatprep.subr.bf16.mxu0 0
      %800 = vmatpush1.bf16.msra.mxu0 0
      %801 = vmatprep.subr.bf16.mxu0 0
      %802 = vmatpush1.bf16.msra.mxu0 0
      %803 = vmatprep.subr.bf16.mxu0 0
      %804 = vmatpush1.bf16.msra.mxu0 0
      %805 = vmatprep.subr.bf16.mxu0 0
      %806 = vmatpush1.bf16.msra.mxu0 0
      %807 = vmatprep.subr.bf16.mxu0 0
      %808 = vmatpush1.bf16.msra.mxu0 0
      %809 = vmatprep.subr.bf16.mxu0 0
      %810 = vmatpush1.bf16.msra.mxu0 0
      %811 = vmatprep.subr.bf16.mxu0 0
      %812 = vmatpush1.bf16.msra.mxu0 0
      %813 = vmatprep.subr.bf16.mxu0 0
      %814 = vmatpush1.bf16.msra.mxu0 0
      %815 = vmatprep.subr.bf16.mxu0 0
      %816 = vmatpush1.bf16.msra.mxu0 0
      %817 = vmatprep.subr.bf16.mxu0 0
      %818 = vmatpush1.bf16.msra.mxu0 0
      %819 = vmatprep.subr.bf16.mxu0 0
      %820 = vmatpush1.bf16.msra.mxu0 0
      %821 = vmatprep.subr.bf16.mxu0 0
      %822 = vmatpush1.bf16.msra.mxu0 0
      %823 = vmatprep.subr.bf16.mxu0 0
      %824 = vmatpush1.bf16.msra.mxu0 0
      %825 = vmatprep.mubr.bf16.mxu0 0
      %826 = vmatmul.mubr.bf16.gmra.mrb[0].mxu0 %v791
      %v827 = vpop.f32.mrb[0].mxu0
      %v828 = vadd.f32 0.0, %v827
      %v829 = vpop.f32.mrb[0].mxu0
      %v830 = vpop.f32.mrb[0].mxu0
      %v831 = vadd.f32 0.0, %v830
      %v832 = vpop.f32.mrb[0].mxu0
      %833 = vdwg.mxu0
      %v834 = vmax.f32 %v828, 0.0
      %v835 = vmax.f32 %v831, 0.0
      %v836 = vld [vmem:[%s8] sm:$0xf]
      %v837 = vld [vmem:[%s8 + $0x4] sm:$0xf]
      %v838 = vld [vmem:[%s8 + $0x8] sm:$0xf]
      %v839 = vld [vmem:[%s8 + $0xc] sm:$0xf]
      %v840 = vpack.c.bf16 %v835, %v834
      %v845 = vunpack.c.l.b16 %v836
      %v846 = vunpack.c.l.b16 %v837
      %v847 = vunpack.c.l.b16 %v838
      %v848 = vunpack.c.l.b16 %v839
      %v849 = vpack.c.b16 %v846, %v845
      %v850 = vpack.c.b16 %v848, %v847
      %v852 = vsel %vm582, %v849, 0
      %v855 = vsel %vm582, %v850, 0
      %857 = vmatprep.subr.bf16.mxu0 0
      %858 = vmatpush1.bf16.msra.mxu0 %v840
      %859 = vmatprep.subr.bf16.mxu0 0
      %860 = vmatpush1.bf16.msra.mxu0 0
      %861 = vmatprep.subr.bf16.mxu0 0
      %862 = vmatpush1.bf16.msra.mxu0 0
      %863 = vmatprep.subr.bf16.mxu0 0
      %864 = vmatpush1.bf16.msra.mxu0 0
      %865 = vmatprep.subr.bf16.mxu0 0
      %866 = vmatpush1.bf16.msra.mxu0 0
      %867 = vmatprep.subr.bf16.mxu0 0
      %868 = vmatpush1.bf16.msra.mxu0 0
      %869 = vmatprep.subr.bf16.mxu0 0
      %870 = vmatpush1.bf16.msra.mxu0 0
      %871 = vmatprep.subr.bf16.mxu0 0
      %872 = vmatpush1.bf16.msra.mxu0 0
      %873 = vmatprep.subr.bf16.mxu0 0
      %874 = vmatpush1.bf16.msra.mxu0 0
      %875 = vmatprep.subr.bf16.mxu0 0
      %876 = vmatpush1.bf16.msra.mxu0 0
      %877 = vmatprep.subr.bf16.mxu0 0
      %878 = vmatpush1.bf16.msra.mxu0 0
      %879 = vmatprep.subr.bf16.mxu0 0
      %880 = vmatpush1.bf16.msra.mxu0 0
      %881 = vmatprep.subr.bf16.mxu0 0
      %882 = vmatpush1.bf16.msra.mxu0 0
      %883 = vmatprep.subr.bf16.mxu0 0
      %884 = vmatpush1.bf16.msra.mxu0 0
      %885 = vmatprep.subr.bf16.mxu0 0
      %886 = vmatpush1.bf16.msra.mxu0 0
      %887 = vmatprep.subr.bf16.mxu0 0
      %888 = vmatpush1.bf16.msra.mxu0 0
      %889 = vmatprep.mubr.bf16.mxu0 0
      %890 = vmatmul.mubr.bf16.gmra.mrb[0].mxu0 %v852
      %v891 = vpop.f32.mrb[0].mxu0
      %v892 = vadd.f32 0.0, %v891
      %v893 = vpop.f32.mrb[0].mxu0
      %v894 = vpop.f32.mrb[0].mxu0
      %v895 = vadd.f32 0.0, %v894
      %v896 = vpop.f32.mrb[0].mxu0
      %897 = vmatprep.mubr.bf16.mxu0 0
      %898 = vmatmul.mubr.bf16.gmra.mrb[0].mxu0 %v855
      %v899 = vpop.f32.mrb[0].mxu0
      %v900 = vadd.f32 0.0, %v899
      %v901 = vpop.f32.mrb[0].mxu0
      %v902 = vpop.f32.mrb[0].mxu0
      %v903 = vadd.f32 0.0, %v902
      %v904 = vpop.f32.mrb[0].mxu0
      %905 = vdwg.mxu0
      %v906 = vpack.c.bf16 %v895, %v892
      %v907 = vpack.c.bf16 %v903, %v900
      %v909 = vsel %vm582, %v906, 0
      %v912 = vsel %vm582, %v907, 0
      %914 = vmatprep.subr.bf16.mxu0 %v676
      %915 = vmatpush1.bf16.msra.mxu0 %v675
      %916 = vmatprep.subr.bf16.mxu0 0
      %917 = vmatpush1.bf16.msra.mxu0 0
      %918 = vmatprep.subr.bf16.mxu0 0
      %919 = vmatpush1.bf16.msra.mxu0 0
      %920 = vmatprep.subr.bf16.mxu0 0
      %921 = vmatpush1.bf16.msra.mxu0 0
      %922 = vmatprep.subr.bf16.mxu0 0
      %923 = vmatpush1.bf16.msra.mxu0 0
      %924 = vmatprep.subr.bf16.mxu0 0
      %925 = vmatpush1.bf16.msra.mxu0 0
      %926 = vmatprep.subr.bf16.mxu0 0
      %927 = vmatpush1.bf16.msra.mxu0 0
      %928 = vmatprep.subr.bf16.mxu0 0
      %929 = vmatpush1.bf16.msra.mxu0 0
      %930 = vmatprep.subr.bf16.mxu0 0
      %931 = vmatpush1.bf16.msra.mxu0 0
      %932 = vmatprep.subr.bf16.mxu0 0
      %933 = vmatpush1.bf16.msra.mxu0 0
      %934 = vmatprep.subr.bf16.mxu0 0
      %935 = vmatpush1.bf16.msra.mxu0 0
      %936 = vmatprep.subr.bf16.mxu0 0
      %937 = vmatpush1.bf16.msra.mxu0 0
      %938 = vmatprep.subr.bf16.mxu0 0
      %939 = vmatpush1.bf16.msra.mxu0 0
      %940 = vmatprep.subr.bf16.mxu0 0
      %941 = vmatpush1.bf16.msra.mxu0 0
      %942 = vmatprep.subr.bf16.mxu0 0
      %943 = vmatpush1.bf16.msra.mxu0 0
      %944 = vmatprep.subr.bf16.mxu0 0
      %945 = vmatpush1.bf16.msra.mxu0 0
      %946 = vmatprep.mubr.bf16.mxu0 0
      %947 = vmatmul.mubr.bf16.gmra.mrb[0].mxu0 %v909
      %v948 = vpop.f32.mrb[0].mxu0
      %v949 = vadd.f32 0.0, %v948
      %v950 = vpop.f32.mrb[0].mxu0
      %v951 = vadd.f32 0.0, %v950
      %v952 = vpop.f32.mrb[0].mxu0
      %v953 = vadd.f32 0.0, %v952
      %v954 = vpop.f32.mrb[0].mxu0
      %v955 = vadd.f32 0.0, %v954
      %956 = vmatprep.mubr.bf16.mxu0 0
      %957 = vmatmul.mubr.bf16.gmra.mrb[0].mxu0 %v912
      %v958 = vpop.f32.mrb[0].mxu0
      %v959 = vadd.f32 0.0, %v958
      %v960 = vpop.f32.mrb[0].mxu0
      %v961 = vadd.f32 0.0, %v960
      %v962 = vpop.f32.mrb[0].mxu0
      %v963 = vadd.f32 0.0, %v962
      %v964 = vpop.f32.mrb[0].mxu0
      %v965 = vadd.f32 0.0, %v964
      %966 = vdwg.mxu0
      %v967 = vunpack.c.l.bf16 %v351
      %v968 = vunpack.c.h.bf16 %v351
      %v969 = vunpack.c.l.bf16 %v352
      %v970 = vunpack.c.h.bf16 %v352
      %v971 = vunpack.c.l.bf16 %v353
      %v972 = vunpack.c.h.bf16 %v353
      %v973 = vunpack.c.l.bf16 %v354
      %v974 = vunpack.c.h.bf16 %v354
      %v975 = vadd.f32 %v967, %v949
      %v976 = vadd.f32 %v968, %v951
      %v977 = vadd.f32 %v969, %v953
      %v978 = vadd.f32 %v970, %v955
      %v979 = vadd.f32 %v971, %v959
      %v980 = vadd.f32 %v972, %v961
      %v981 = vadd.f32 %v973, %v963
      %v982 = vadd.f32 %v974, %v965
      %v983 = vpack.c.bf16 %v977, %v975
      %v984 = vpack.c.bf16 %v978, %v976
      %v985 = vpack.c.bf16 %v981, %v979
      %v986 = vpack.c.bf16 %v982, %v980
      %v991 = vunpack.c.l.b16 %v983
      %v992 = vunpack.c.l.b16 %v984
      %v993 = vunpack.c.h.b16 %v983
      %v994 = vunpack.c.h.b16 %v984
      %v995 = vunpack.c.l.b16 %v985
      %v996 = vunpack.c.l.b16 %v986
      %v997 = vunpack.c.h.b16 %v985
      %v998 = vunpack.c.h.b16 %v986
      %v999 = vpack.c.b16 %v992, %v991
      %v1000 = vpack.c.b16 %v994, %v993
      %v1001 = vpack.c.b16 %v996, %v995
      %v1002 = vpack.c.b16 %v998, %v997
      %1007 = vst [vmem:[%s349] sm:$0xff] %v999
      %1008 = vst [vmem:[%s349 + $0x8] sm:$0xff] %v1000
      %1009 = vst [vmem:[%s349 + $0x10] sm:$0xff] %v1001
      %1010 = vst [vmem:[%s349 + $0x18] sm:$0xff] %v1002
      %p1011 = scmp.lt.s32.totalorder %s20, 1
      %s1012 = scalar_select %p1011, %s20, 1
      %s1013 = smul.addr %s1012, 8
      %s1014 = smul.addr %s1013, 4
      %s1015 = scalar_lea.vmem %s9, %s1014
      // Predicated region
      $region57: #{gfam_forward.1} parent=55 // pred_check
        %p1016 = pneg %p237
      $region58: #{gfam_forward.1} parent=55 // pred_check_branch
        %1018 = sbr.rel (%p1016) target = $region60
      $region59: #{gfam_forward.1} parent=55 // pred_region
        _
      $region60: #{gfam_forward.1} parent=55 // pred_fallthru
        _
    $region56: #{gfam_forward.1} parent=5 // pred_fallthru
      _
    %p1019 = scmp.le.s32.totalorder 2, %s15
    // Predicated region
    $region61: #{gfam_forward.1} parent=5 // pred_check
      %p1020 = pneg %p1019
    $region62: #{gfam_forward.1} parent=5 // pred_check_branch
      %1022 = sbr.rel (%p1020) target = $region64
    $region63: #{gfam_forward.1} parent=5 // pred_region
      %s1023 = ssub.s32 %s15, 2
      // Predicated region
      $region65: #{gfam_forward.1} parent=63 // pred_check
        %p1024 = pneg %p243
      $region66: #{gfam_forward.1} parent=63 // pred_check_branch
        %1026 = sbr.rel (%p1024) target = $region68
      $region67: #{gfam_forward.1} parent=63 // pred_region
        %p1027 = scmp.lt.s32.totalorder %s21, 1
        %s1028 = scalar_select %p1027, %s21, 1
        %s1029 = smul.addr %s1028, 8
        %s1030 = smul.addr %s1029, 4
        %s1031 = scalar_lea.vmem %s9, %s1030
      $region68: #{gfam_forward.1} parent=63 // pred_fallthru
        _
    $region64: #{gfam_forward.1} parent=5 // pred_fallthru
      _
  $region6: #{gfam_forward.1} parent=0 // loop_footer
    %s19 = sadd.s32 1, %s15
  $region7: #{gfam_forward.1} parent=0 // loop_footer_branch
    %14 = sbr.rel target = $region3
  $region8: #{gfam_forward.1} parent=0 // loop_exit
    _

</llo_original>
